<compile_context>
chip_gen: v7x
topology: tpu7x:2x2x1
jax: 0.10.0
libtpu: 0.0.40
codegen_flags: <defaults>
</compile_context>

<pallas_src>
import functools
import math

import jax
import jax.numpy as jnp
from jax import lax
from jax.experimental import pallas as pl
from jax.experimental.pallas import tpu as pltpu


def _round_up(x, m):
    return ((x + m - 1) // m) * m


def _arc_margin_kernel(x_ref, w_ref, label_ref, out_ref, xn_ref, *,
                       scale, cos_m, sin_m, th, mm, easy_margin, ls_eps,
                       out_features, class_tile, use_bf16_matmul):
    j = pl.program_id(1)

    # Normalize the (tb, D) activation tile once per batch tile; the x block
    # stays VMEM-resident across the class axis (constant index_map).
    @pl.when(j == 0)
    def _():
        x = x_ref[...].astype(jnp.float32)
        ssq = jnp.sum(x * x, axis=-1, keepdims=True)
        # F.normalize(eps=1e-12)  <=>  x * rsqrt(max(sum(x^2), 1e-24))
        xn_ref[...] = x * lax.rsqrt(jnp.maximum(ssq, 1e-24))

    # Normalize this (tc, D) weight tile (VPU/XLU work, hides under the MXU).
    w = w_ref[...].astype(jnp.float32)
    wssq = jnp.sum(w * w, axis=-1, keepdims=True)
    wn = w * lax.rsqrt(jnp.maximum(wssq, 1e-24))

    xn = xn_ref[...]
    if use_bf16_matmul:
        xn = xn.astype(jnp.bfloat16)
        wn = wn.astype(jnp.bfloat16)

    # cosine = xn @ wn.T  (contract feature axis of both operands), f32 accum.
    cosine = lax.dot_general(xn, wn, (((1,), (1,)), ((), ())),
                             preferred_element_type=jnp.float32)

    # One-hot mask built from the GLOBAL class index (padded rows have
    # label = -1 and padded class columns have global index >= out_features,
    # so neither ever matches a real label).
    label = label_ref[...]                                   # (tb, 1) int32
    col = lax.broadcasted_iota(jnp.int32, cosine.shape, 1) + j * class_tile
    mask = col == label

    if ls_eps == 0.0:
        # Fast path: margin math only on the label column of each row.
        cos_lab = jnp.sum(jnp.where(mask, cosine, 0.0), axis=-1, keepdims=True)
        sin_lab = jnp.sqrt(jnp.maximum(1.0 - cos_lab * cos_lab, 0.0))
        phi_lab = cos_lab * cos_m - sin_lab * sin_m
        if easy_margin:
            phi_lab = jnp.where(cos_lab > 0.0, phi_lab, cos_lab)
        else:
            phi_lab = jnp.where(cos_lab > th, phi_lab, cos_lab - mm)
        out = jnp.where(mask, phi_lab, cosine) * scale
    else:
        # Label-smoothing path: full-tile arc-margin math.
        sine = jnp.sqrt(jnp.maximum(1.0 - cosine * cosine, 0.0))
        phi = cosine * cos_m - sine * sin_m
        if easy_margin:
            phi = jnp.where(cosine > 0.0, phi, cosine)
        else:
            phi = jnp.where(cosine > th, phi, cosine - mm)
        one_hot = mask.astype(jnp.float32)
        # NOTE: smoothing uses the TRUE out_features, not the padded width.
        one_hot = (1.0 - ls_eps) * one_hot + ls_eps / out_features
        out = (one_hot * phi + (1.0 - one_hot) * cosine) * scale

    out_ref[...] = out.astype(out_ref.dtype)


def arc_margin_product(x, weight, label, *, scale=30.0, margin=0.5,
                       easy_margin=False, ls_eps=0.0,
                       batch_tile=None, class_tile=None,
                       use_bf16_matmul=False):
    B, D = x.shape
    C, D2 = weight.shape
    assert D == D2

    # Tile sizes: sublane-aligned batch tile, lane-aligned class tile.
    tb = _round_up(batch_tile or min(_round_up(B, 8), 256), 8)
    tc = _round_up(class_tile or min(_round_up(C, 128), 2048), 128)
    Bp = _round_up(B, tb)
    Cp = _round_up(C, tc)

    x_p = jnp.pad(x, ((0, Bp - B), (0, 0))) if Bp != B else x
    w_p = jnp.pad(weight, ((0, Cp - C), (0, 0))) if Cp != C else weight
    label_p = jnp.full((Bp, 1), -1, dtype=jnp.int32)
    label_p = label_p.at[:B, 0].set(label.astype(jnp.int32))

    nb, nc = Bp // tb, Cp // tc

    kernel = functools.partial(
        _arc_margin_kernel,
        scale=float(scale),
        cos_m=float(math.cos(margin)),
        sin_m=float(math.sin(margin)),
        th=float(math.cos(math.pi - margin)),
        mm=float(math.sin(math.pi - margin) * margin),
        easy_margin=bool(easy_margin),
        ls_eps=float(ls_eps),
        out_features=C,
        class_tile=tc,
        use_bf16_matmul=bool(use_bf16_matmul),
    )

    # Double-buffered x / W / out / label blocks + xn scratch, with headroom.
    tile_bytes = 4 * (2 * (tb * D + tc * D + tb * tc + tb) + tb * D)
    vmem_limit = int(min(64 * 1024 * 1024,
                         max(32 * 1024 * 1024, 2 * tile_bytes)))

    cost = pl.CostEstimate(
        flops=int(2 * Bp * Cp * D),
        transcendentals=int(Bp * Cp),
        bytes_accessed=int(4 * (Bp * D + nb * Cp * D + Bp * Cp + Bp)),
    )

    out_p = pl.pallas_call(
        kernel,
        out_shape=jax.ShapeDtypeStruct((Bp, Cp), jnp.float32),
        grid_spec=pltpu.PrefetchScalarGridSpec(
            num_scalar_prefetch=0,
            grid=(nb, nc),
            in_specs=[
                pl.BlockSpec((tb, D), lambda i, j: (i, 0)),   # x: resident over j
                pl.BlockSpec((tc, D), lambda i, j: (j, 0)),   # W: streamed tiles
                pl.BlockSpec((tb, 1), lambda i, j: (i, 0)),   # labels per batch tile
            ],
            out_specs=pl.BlockSpec((tb, tc), lambda i, j: (i, j)),
            scratch_shapes=[pltpu.VMEM((tb, D), jnp.float32)],  # normalized x
        ),
        compiler_params=pltpu.CompilerParams(
            # class axis carries the xn scratch -> must stay "arbitrary";
            # batch axis parallel so megacore can shard batch tiles.
            dimension_semantics=("parallel", "arbitrary"),
            vmem_limit_bytes=vmem_limit,
        ),
        cost_estimate=cost,
    )(x_p, w_p, label_p)

    return out_p[:B, :C]


def _reference(x, weight, label, *, scale=30.0, margin=0.5,
               easy_margin=False, ls_eps=0.0):
    xn = x / jnp.maximum(jnp.linalg.norm(x, axis=1, keepdims=True), 1e-12)
    wn = weight / jnp.maximum(jnp.linalg.norm(weight, axis=1, keepdims=True), 1e-12)
    cosine = xn @ wn.T
    sine = jnp.sqrt(jnp.maximum(1.0 - cosine ** 2, 0.0))
    cos_m, sin_m = math.cos(margin), math.sin(margin)
    th = math.cos(math.pi - margin)
    mm = math.sin(math.pi - margin) * margin
    phi = cosine * cos_m - sine * sin_m
    phi = (jnp.where(cosine > 0, phi, cosine) if easy_margin
           else jnp.where(cosine > th, phi, cosine - mm))
    one_hot = jax.nn.one_hot(label, cosine.shape[1], dtype=jnp.float32)
    if ls_eps > 0:
        one_hot = (1 - ls_eps) * one_hot + ls_eps / cosine.shape[1]
    return (one_hot * phi + (1.0 - one_hot) * cosine) * scale


if __name__ == "__main__":
    key = jax.random.PRNGKey(0)
    kx1, kw1, kl1, kx2, kw2, kl2 = jax.random.split(key, 6)

    # Case 1: aligned shapes, ls_eps=0 fast path, single-tile grid.
    B1, IN1, OUT1 = 8, 32, 128
    x1 = jax.random.normal(kx1, (B1, IN1), dtype=jnp.float32)
    bound1 = math.sqrt(6.0 / (IN1 + OUT1))          # xavier_uniform_
    w1 = jax.random.uniform(kw1, (OUT1, IN1), dtype=jnp.float32,
                            minval=-bound1, maxval=bound1)
    l1 = jax.random.randint(kl1, (B1,), 0, OUT1, dtype=jnp.int32)

    out1 = jax.block_until_ready(
        arc_margin_product(x1, w1, l1, scale=30.0, margin=0.5,
                           easy_margin=False, ls_eps=0.0))
    ref1 = _reference(x1, w1, l1, scale=30.0, margin=0.5,
                      easy_margin=False, ls_eps=0.0)
    assert out1.shape == (B1, OUT1)
    assert jnp.allclose(out1, ref1, atol=1e-4, rtol=1e-4), "case 1 mismatch"

    # Case 2: unaligned B/C (padding + masking), multi-tile grid on both axes,
    # ls_eps>0 + easy_margin path.
    B2, IN2, OUT2 = 10, 32, 200
    x2 = jax.random.normal(kx2, (B2, IN2), dtype=jnp.float32)
    bound2 = math.sqrt(6.0 / (IN2 + OUT2))
    w2 = jax.random.uniform(kw2, (OUT2, IN2), dtype=jnp.float32,
                            minval=-bound2, maxval=bound2)
    l2 = jax.random.randint(kl2, (B2,), 0, OUT2, dtype=jnp.int32)

    out2 = jax.block_until_ready(
        arc_margin_product(x2, w2, l2, scale=30.0, margin=0.3,
                           easy_margin=True, ls_eps=0.1,
                           batch_tile=8, class_tile=128))
    ref2 = _reference(x2, w2, l2, scale=30.0, margin=0.3,
                      easy_margin=True, ls_eps=0.1)
    assert out2.shape == (B2, OUT2)
    assert jnp.allclose(out2, ref2, atol=1e-4, rtol=1e-4), "case 2 mismatch"

    print("KERNEL_OK")
</pallas_src>

<mosaic_0001>
module attributes {stable_mosaic.version = 11 : i64} {
  func.func @_arc_margin_kernel(%arg0: i32, %arg1: i32, %arg2: memref<8x32xf32, #tpu.memory_space<vmem>>, %arg3: memref<128x32xf32, #tpu.memory_space<vmem>>, %arg4: memref<8x1xi32, #tpu.memory_space<vmem>>, %arg5: memref<8x128xf32, #tpu.memory_space<vmem>>, %arg6: memref<8x32xf32, #tpu.memory_space<vmem>>) attributes {dimension_semantics = [#tpu.dimension_semantics<parallel>, #tpu.dimension_semantics<arbitrary>], iteration_bounds = array<i64: 1, 1>, scalar_prefetch = 0 : i64, scratch_operands = 1 : i64, tpu.core_type = #tpu.core_type<tc>, window_params = [{transform_indices = @transform_0, window_bounds = array<i64: 8, 32>}, {transform_indices = @transform_1, window_bounds = array<i64: 128, 32>}, {transform_indices = @transform_2, window_bounds = array<i64: 8, 1>}, {transform_indices = @transform_3, window_bounds = array<i64: 8, 128>}]} {
    %c0_i32 = arith.constant 0 : i32
    %0 = arith.cmpi eq, %arg1, %c0_i32 : i32
    %1 = arith.extui %0 : i1 to i32
    %c0_i32_0 = arith.constant 0 : i32
    %2 = arith.cmpi ne, %1, %c0_i32_0 : i32
    scf.if %2 {
      %c0_19 = arith.constant 0 : index
      %c0_20 = arith.constant 0 : index
      %47 = vector.load %arg2[%c0_19, %c0_20] : memref<8x32xf32, #tpu.memory_space<vmem>>, vector<8x32xf32>
      %48 = arith.mulf %47, %47 : vector<8x32xf32>
      %cst_21 = arith.constant dense<0.000000e+00> : vector<8xf32>
      %49 = vector.multi_reduction <add>, %48, %cst_21 [1] : vector<8x32xf32> to vector<8xf32>
      %50 = vector.shape_cast %49 : vector<8xf32> to vector<8x1xf32>
      %cst_22 = arith.constant 1.000000e-24 : f32
      %51 = vector.broadcast %cst_22 : f32 to vector<8x1xf32>
      %52 = arith.maximumf %50, %51 : vector<8x1xf32>
      %53 = math.rsqrt %52 : vector<8x1xf32>
      %54 = vector.broadcast %53 : vector<8x1xf32> to vector<8x32xf32>
      %55 = arith.mulf %47, %54 : vector<8x32xf32>
      %c0_23 = arith.constant 0 : index
      %c0_24 = arith.constant 0 : index
      %56 = vector.load %arg6[%c0_23, %c0_24] : memref<8x32xf32, #tpu.memory_space<vmem>>, vector<8x32xf32>
      tpu.vector_store %arg6[%c0_23, %c0_24], %55 {strides = array<i32>} : memref<8x32xf32, #tpu.memory_space<vmem>>, vector<8x32xf32>,
    } else {
    }
    %c0 = arith.constant 0 : index
    %c0_1 = arith.constant 0 : index
    %3 = vector.load %arg3[%c0, %c0_1] : memref<128x32xf32, #tpu.memory_space<vmem>>, vector<128x32xf32>
    %4 = arith.mulf %3, %3 : vector<128x32xf32>
    %cst = arith.constant dense<0.000000e+00> : vector<128xf32>
    %5 = vector.multi_reduction <add>, %4, %cst [1] : vector<128x32xf32> to vector<128xf32>
    %6 = vector.shape_cast %5 : vector<128xf32> to vector<128x1xf32>
    %cst_2 = arith.constant 1.000000e-24 : f32
    %7 = vector.broadcast %cst_2 : f32 to vector<128x1xf32>
    %8 = arith.maximumf %6, %7 : vector<128x1xf32>
    %9 = math.rsqrt %8 : vector<128x1xf32>
    %10 = vector.broadcast %9 : vector<128x1xf32> to vector<128x32xf32>
    %11 = arith.mulf %3, %10 : vector<128x32xf32>
    %c0_3 = arith.constant 0 : index
    %c0_4 = arith.constant 0 : index
    %12 = vector.load %arg6[%c0_3, %c0_4] : memref<8x32xf32, #tpu.memory_space<vmem>>, vector<8x32xf32>
    %cst_5 = arith.constant dense<0.000000e+00> : vector<8x128xf32>
    %13 = tpu.matmul %12, %11, %cst_5 {dimension_numbers = #tpu.dot_dimension_numbers<[1], [1], [0], [0], [0, 0, 1, 0], [], []>} : vector<8x32xf32>, vector<128x32xf32>, vector<8x128xf32> -> vector<8x128xf32>
    %c0_6 = arith.constant 0 : index
    %c0_7 = arith.constant 0 : index
    %14 = vector.load %arg4[%c0_6, %c0_7] : memref<8x1xi32, #tpu.memory_space<vmem>>, vector<8x1xi32>
    %15 = tpu.iota {dimensions = array<i32: 1>} : vector<8x128xi32>
    %c128_i32 = arith.constant 128 : i32
    %16 = arith.muli %arg1, %c128_i32 : i32
    %17 = vector.broadcast %16 : i32 to vector<8x128xi32>
    %18 = arith.addi %15, %17 : vector<8x128xi32>
    %19 = vector.broadcast %14 : vector<8x1xi32> to vector<8x128xi32>
    %20 = arith.cmpi eq, %18, %19 : vector<8x128xi32>
    %cst_8 = arith.constant 0.000000e+00 : f32
    %21 = vector.broadcast %cst_8 : f32 to vector<8x128xf32>
    %22 = arith.select %20, %13, %21 : vector<8x128xi1>, vector<8x128xf32>
    %cst_9 = arith.constant dense<0.000000e+00> : vector<8xf32>
    %23 = vector.multi_reduction <add>, %22, %cst_9 [1] : vector<8x128xf32> to vector<8xf32>
    %24 = vector.shape_cast %23 : vector<8xf32> to vector<8x1xf32>
    %25 = arith.mulf %24, %24 : vector<8x1xf32>
    %cst_10 = arith.constant 1.000000e+00 : f32
    %26 = vector.broadcast %cst_10 : f32 to vector<8x1xf32>
    %27 = arith.subf %26, %25 : vector<8x1xf32>
    %cst_11 = arith.constant 0.000000e+00 : f32
    %28 = vector.broadcast %cst_11 : f32 to vector<8x1xf32>
    %29 = arith.maximumf %27, %28 : vector<8x1xf32>
    %30 = math.sqrt %29 : vector<8x1xf32>
    %cst_12 = arith.constant 0.87758255 : f32
    %31 = vector.broadcast %cst_12 : f32 to vector<8x1xf32>
    %32 = arith.mulf %24, %31 : vector<8x1xf32>
    %cst_13 = arith.constant 0.47942555 : f32
    %33 = vector.broadcast %cst_13 : f32 to vector<8x1xf32>
    %34 = arith.mulf %30, %33 : vector<8x1xf32>
    %35 = arith.subf %32, %34 : vector<8x1xf32>
    %cst_14 = arith.constant -0.87758255 : f32
    %36 = vector.broadcast %cst_14 : f32 to vector<8x1xf32>
    %37 = arith.cmpf ogt, %24, %36 : vector<8x1xf32>
    %cst_15 = arith.constant 0.239712775 : f32
    %38 = vector.broadcast %cst_15 : f32 to vector<8x1xf32>
    %39 = arith.subf %24, %38 : vector<8x1xf32>
    %40 = arith.select %37, %35, %39 : vector<8x1xi1>, vector<8x1xf32>
    %41 = vector.shape_cast %40 : vector<8x1xf32> to vector<8x1xf32>
    %42 = vector.broadcast %41 : vector<8x1xf32> to vector<8x128xf32>
    %43 = arith.select %20, %42, %13 : vector<8x128xi1>, vector<8x128xf32>
    %cst_16 = arith.constant 3.000000e+01 : f32
    %44 = vector.broadcast %cst_16 : f32 to vector<8x128xf32>
    %45 = arith.mulf %43, %44 : vector<8x128xf32>
    %c0_17 = arith.constant 0 : index
    %c0_18 = arith.constant 0 : index
    %46 = vector.load %arg5[%c0_17, %c0_18] : memref<8x128xf32, #tpu.memory_space<vmem>>, vector<8x128xf32>
    tpu.vector_store %arg5[%c0_17, %c0_18], %45 {strides = array<i32>} : memref<8x128xf32, #tpu.memory_space<vmem>>, vector<8x128xf32>,
    return
  }
  func.func @transform_0(%arg0: i32, %arg1: i32) -> (i32, i32) {
    %c0_i32 = arith.constant 0 : i32
    %c0_i32_0 = arith.constant 0 : i32
    return %arg0, %c0_i32 : i32, i32
  }
  func.func @transform_1(%arg0: i32, %arg1: i32) -> (i32, i32) {
    %c0_i32 = arith.constant 0 : i32
    %c0_i32_0 = arith.constant 0 : i32
    return %arg1, %c0_i32 : i32, i32
  }
  func.func @transform_2(%arg0: i32, %arg1: i32) -> (i32, i32) {
    %c0_i32 = arith.constant 0 : i32
    %c0_i32_0 = arith.constant 0 : i32
    return %arg0, %c0_i32 : i32, i32
  }
  func.func @transform_3(%arg0: i32, %arg1: i32) -> (i32, i32) {
    %c0_i32 = arith.constant 0 : i32
    return %arg0, %arg1 : i32, i32
  }
}

</mosaic_0001>

<llo_original>
// kernel: tpu_custom_call.1
$region0: #{tpu_custom_call.1}
  #allocation0 [shape = 'u32[]', space=smem, size = 0x4, offset = 0x4, fixed_abs, tag = 'smem constant byte address 0x4 - core index']
  #allocation1 [shape = 'u32[144,128]{1,0:T(1,128)}', space=vmem, size = 0x12000, scoped, tag = 'internal scratch']
  #allocation2 [shape = 'f32[8,32]{1,0:T(8,128)}', space=vmem, size = 0x1000, scoped, tag = 'scratch operand']
  %s0 = inlined_call_operand.vmem [shape: f32[8,32], index: 0, kind: input, shape index: {}]
  %s1 = inlined_call_operand.vmem [shape: f32[128,32], index: 1, kind: input, shape index: {}]
  %s2 = inlined_call_operand.vmem [shape: s32[8,1], index: 2, kind: input, shape index: {}]
  %s3 = inlined_call_operand.hbm [shape: f32[8,128], index: 3, kind: output, shape index: {}]
  %s4 = sld [smem:[#allocation0]]
  $region26: #{tpu_custom_call.1} parent=0
    _
  %s6 = ssub.s32 1, %s4
  %s7 = scalar_select 0, %s6, %s4
  $region1: #{tpu_custom_call.1} parent=0
    #allocation3 [shape = 'u8[4096]{0}', space=vmem, size = 0x1000, scoped, tag = 'output window, operand 0, single buffered']
    #allocation4 [shape = 's32[1]{0}', space=sflag, size = 0x4, scoped, tag = 'scoped memory for tpu_custom_call.1']
    %8 = vsyncpa [#allocation4], 0
    // Predicated region
    $region2: #{tpu_custom_call.1} parent=1 // pred_check
      _
    $region3: #{tpu_custom_call.1} parent=1 // pred_check_branch
      %10 = sbr.rel (0) target = $region5
    $region4: #{tpu_custom_call.1} parent=1 // pred_region
      _
    $region5: #{tpu_custom_call.1} parent=1 // pred_fallthru
      _
    // Predicated region
    $region6: #{tpu_custom_call.1} parent=1 // pred_check
      _
    $region7: #{tpu_custom_call.1} parent=1 // pred_check_branch
      %12 = sbr.rel (0) target = $region9
    $region8: #{tpu_custom_call.1} parent=1 // pred_region
      _
    $region9: #{tpu_custom_call.1} parent=1 // pred_fallthru
      _
    // Predicated region
    $region10: #{tpu_custom_call.1} parent=1 // pred_check
      _
    $region11: #{tpu_custom_call.1} parent=1 // pred_check_branch
      %14 = sbr.rel (0) target = $region13
    $region12: #{tpu_custom_call.1} parent=1 // pred_region
      _
    $region13: #{tpu_custom_call.1} parent=1 // pred_fallthru
      _
    %p15 = scmp.eq.s32.totalorder 0, 0
    // Predicated region
    $region14: #{tpu_custom_call.1} parent=1 // pred_check
      %p16 = pneg %p15
    $region15: #{tpu_custom_call.1} parent=1 // pred_check_branch
      %18 = sbr.rel (%p16) target = $region17
    $region16: #{tpu_custom_call.1} parent=1 // pred_region
      %v19 = vld [vmem:[%s0] sm:$0xff]
      %v20 = vmul.f32 %v19, %v19
      %vm21 = vcmask 261120
      %v22 = vsel %vm21, %v20, 0.0
      %23 = vadd.xlane.f32.xlu0 %v22
      %v24 = vpop.xlane.xlu0 %23
      %v25 = vmax.f32 %v24, 1e-24
      %v26 = vrsqrt.pop %v25
      %v27 = vmul.f32 %v19, %v26
      %28 = vst.msk [vmem:[#allocation2] sm:$0xff] %vm21, %v27
    $region17: #{tpu_custom_call.1} parent=1 // pred_fallthru
      _
    %v29 = vld [vmem:[%s1] sm:$0xff]
    %v30 = vld [vmem:[%s1 + $0x8] sm:$0xff]
    %v31 = vld [vmem:[%s1 + $0x10] sm:$0xff]
    %v32 = vld [vmem:[%s1 + $0x18] sm:$0xff]
    %v33 = vld [vmem:[%s1 + $0x20] sm:$0xff]
    %v34 = vld [vmem:[%s1 + $0x28] sm:$0xff]
    %v35 = vld [vmem:[%s1 + $0x30] sm:$0xff]
    %v36 = vld [vmem:[%s1 + $0x38] sm:$0xff]
    %v37 = vld [vmem:[%s1 + $0x40] sm:$0xff]
    %v38 = vld [vmem:[%s1 + $0x48] sm:$0xff]
    %v39 = vld [vmem:[%s1 + $0x50] sm:$0xff]
    %v40 = vld [vmem:[%s1 + $0x58] sm:$0xff]
    %v41 = vld [vmem:[%s1 + $0x60] sm:$0xff]
    %v42 = vld [vmem:[%s1 + $0x68] sm:$0xff]
    %v43 = vld [vmem:[%s1 + $0x70] sm:$0xff]
    %v44 = vld [vmem:[%s1 + $0x78] sm:$0xff]
    %v45 = vmul.f32 %v29, %v29
    %v46 = vmul.f32 %v30, %v30
    %v47 = vmul.f32 %v31, %v31
    %v48 = vmul.f32 %v32, %v32
    %v49 = vmul.f32 %v33, %v33
    %v50 = vmul.f32 %v34, %v34
    %v51 = vmul.f32 %v35, %v35
    %v52 = vmul.f32 %v36, %v36
    %v53 = vmul.f32 %v37, %v37
    %v54 = vmul.f32 %v38, %v38
    %v55 = vmul.f32 %v39, %v39
    %v56 = vmul.f32 %v40, %v40
    %v57 = vmul.f32 %v41, %v41
    %v58 = vmul.f32 %v42, %v42
    %v59 = vmul.f32 %v43, %v43
    %v60 = vmul.f32 %v44, %v44
    %vm61 = vcmask 261120
    %v62 = vsel %vm61, %v45, 0.0
    %63 = vadd.xlane.f32.xlu0 %v62
    %v64 = vpop.xlane.xlu0 %63
    %v65 = vsel %vm61, %v46, 0.0
    %66 = vadd.xlane.f32.xlu0 %v65
    %v67 = vpop.xlane.xlu0 %66
    %v68 = vsel %vm61, %v47, 0.0
    %69 = vadd.xlane.f32.xlu0 %v68
    %v70 = vpop.xlane.xlu0 %69
    %v71 = vsel %vm61, %v48, 0.0
    %72 = vadd.xlane.f32.xlu0 %v71
    %v73 = vpop.xlane.xlu0 %72
    %v74 = vsel %vm61, %v49, 0.0
    %75 = vadd.xlane.f32.xlu0 %v74
    %v76 = vpop.xlane.xlu0 %75
    %v77 = vsel %vm61, %v50, 0.0
    %78 = vadd.xlane.f32.xlu0 %v77
    %v79 = vpop.xlane.xlu0 %78
    %v80 = vsel %vm61, %v51, 0.0
    %81 = vadd.xlane.f32.xlu0 %v80
    %v82 = vpop.xlane.xlu0 %81
    %v83 = vsel %vm61, %v52, 0.0
    %84 = vadd.xlane.f32.xlu0 %v83
    %v85 = vpop.xlane.xlu0 %84
    %v86 = vsel %vm61, %v53, 0.0
    %87 = vadd.xlane.f32.xlu0 %v86
    %v88 = vpop.xlane.xlu0 %87
    %v89 = vsel %vm61, %v54, 0.0
    %90 = vadd.xlane.f32.xlu0 %v89
    %v91 = vpop.xlane.xlu0 %90
    %v92 = vsel %vm61, %v55, 0.0
    %93 = vadd.xlane.f32.xlu0 %v92
    %v94 = vpop.xlane.xlu0 %93
    %v95 = vsel %vm61, %v56, 0.0
    %96 = vadd.xlane.f32.xlu0 %v95
    %v97 = vpop.xlane.xlu0 %96
    %v98 = vsel %vm61, %v57, 0.0
    %99 = vadd.xlane.f32.xlu0 %v98
    %v100 = vpop.xlane.xlu0 %99
    %v101 = vsel %vm61, %v58, 0.0
    %102 = vadd.xlane.f32.xlu0 %v101
    %v103 = vpop.xlane.xlu0 %102
    %v104 = vsel %vm61, %v59, 0.0
    %105 = vadd.xlane.f32.xlu0 %v104
    %v106 = vpop.xlane.xlu0 %105
    %v107 = vsel %vm61, %v60, 0.0
    %108 = vadd.xlane.f32.xlu0 %v107
    %v109 = vpop.xlane.xlu0 %108
    %v110 = vmax.f32 %v64, 1e-24
    %v111 = vmax.f32 %v67, 1e-24
    %v112 = vmax.f32 %v70, 1e-24
    %v113 = vmax.f32 %v73, 1e-24
    %v114 = vmax.f32 %v76, 1e-24
    %v115 = vmax.f32 %v79, 1e-24
    %v116 = vmax.f32 %v82, 1e-24
    %v117 = vmax.f32 %v85, 1e-24
    %v118 = vmax.f32 %v88, 1e-24
    %v119 = vmax.f32 %v91, 1e-24
    %v120 = vmax.f32 %v94, 1e-24
    %v121 = vmax.f32 %v97, 1e-24
    %v122 = vmax.f32 %v100, 1e-24
    %v123 = vmax.f32 %v103, 1e-24
    %v124 = vmax.f32 %v106, 1e-24
    %v125 = vmax.f32 %v109, 1e-24
    %v126 = vrsqrt.pop %v110
    %v127 = vrsqrt.pop %v111
    %v128 = vrsqrt.pop %v112
    %v129 = vrsqrt.pop %v113
    %v130 = vrsqrt.pop %v114
    %v131 = vrsqrt.pop %v115
    %v132 = vrsqrt.pop %v116
    %v133 = vrsqrt.pop %v117
    %v134 = vrsqrt.pop %v118
    %v135 = vrsqrt.pop %v119
    %v136 = vrsqrt.pop %v120
    %v137 = vrsqrt.pop %v121
    %v138 = vrsqrt.pop %v122
    %v139 = vrsqrt.pop %v123
    %v140 = vrsqrt.pop %v124
    %v141 = vrsqrt.pop %v125
    %v142 = vmul.f32 %v29, %v126
    %v143 = vmul.f32 %v30, %v127
    %v144 = vmul.f32 %v31, %v128
    %v145 = vmul.f32 %v32, %v129
    %v146 = vmul.f32 %v33, %v130
    %v147 = vmul.f32 %v34, %v131
    %v148 = vmul.f32 %v35, %v132
    %v149 = vmul.f32 %v36, %v133
    %v150 = vmul.f32 %v37, %v134
    %v151 = vmul.f32 %v38, %v135
    %v152 = vmul.f32 %v39, %v136
    %v153 = vmul.f32 %v40, %v137
    %v154 = vmul.f32 %v41, %v138
    %v155 = vmul.f32 %v42, %v139
    %v156 = vmul.f32 %v43, %v140
    %v157 = vmul.f32 %v44, %v141
    %v158 = vld [vmem:[#allocation2] sm:$0xff]
    %v160 = vsel %vm61, %v158, 0
    %v163 = vsel %vm61, %v142, 0
    %v166 = vsel %vm61, %v143, 0
    %v169 = vsel %vm61, %v144, 0
    %v172 = vsel %vm61, %v145, 0
    %v175 = vsel %vm61, %v146, 0
    %v178 = vsel %vm61, %v147, 0
    %v181 = vsel %vm61, %v148, 0
    %v184 = vsel %vm61, %v149, 0
    %v187 = vsel %vm61, %v150, 0
    %v190 = vsel %vm61, %v151, 0
    %v193 = vsel %vm61, %v152, 0
    %v196 = vsel %vm61, %v153, 0
    %v199 = vsel %vm61, %v154, 0
    %v202 = vsel %vm61, %v155, 0
    %v205 = vsel %vm61, %v156, 0
    %v208 = vsel %vm61, %v157, 0
    %210 = vmatprep.subr.mxu0 0.0
    %211 = vmatpush1.xpose.msra.mxu0 %v163
    %212 = vmatprep.subr.mxu0 0.0
    %213 = vmatpush1.xpose.msra.mxu0 %v166
    %214 = vmatprep.subr.mxu0 0.0
    %215 = vmatpush1.xpose.msra.mxu0 %v169
    %216 = vmatprep.subr.mxu0 0.0
    %217 = vmatpush1.xpose.msra.mxu0 %v172
    %218 = vmatprep.subr.mxu0 0.0
    %219 = vmatpush1.xpose.msra.mxu0 %v175
    %220 = vmatprep.subr.mxu0 0.0
    %221 = vmatpush1.xpose.msra.mxu0 %v178
    %222 = vmatprep.subr.mxu0 0.0
    %223 = vmatpush1.xpose.msra.mxu0 %v181
    %224 = vmatprep.subr.mxu0 0.0
    %225 = vmatpush1.xpose.msra.mxu0 %v184
    %226 = vmatprep.subr.mxu0 0.0
    %227 = vmatpush1.xpose.msra.mxu0 %v187
    %228 = vmatprep.subr.mxu0 0.0
    %229 = vmatpush1.xpose.msra.mxu0 %v190
    %230 = vmatprep.subr.mxu0 0.0
    %231 = vmatpush1.xpose.msra.mxu0 %v193
    %232 = vmatprep.subr.mxu0 0.0
    %233 = vmatpush1.xpose.msra.mxu0 %v196
    %234 = vmatprep.subr.mxu0 0.0
    %235 = vmatpush1.xpose.msra.mxu0 %v199
    %236 = vmatprep.subr.mxu0 0.0
    %237 = vmatpush1.xpose.msra.mxu0 %v202
    %238 = vmatprep.subr.mxu0 0.0
    %239 = vmatpush1.xpose.msra.mxu0 %v205
    %240 = vmatprep.subr.mxu0 0.0
    %241 = vmatpush1.xpose.msra.mxu0 %v208
    %242 = vmatprep.subr.mxu0 0.0
    %243 = vmatpush1.xpose.msra.mxu0 0.0
    %244 = vmatprep.subr.mxu0 0.0
    %245 = vmatpush1.xpose.msra.mxu0 0.0
    %246 = vmatprep.subr.mxu0 0.0
    %247 = vmatpush1.xpose.msra.mxu0 0.0
    %248 = vmatprep.subr.mxu0 0.0
    %249 = vmatpush1.xpose.msra.mxu0 0.0
    %250 = vmatprep.subr.mxu0 0.0
    %251 = vmatpush1.xpose.msra.mxu0 0.0
    %252 = vmatprep.subr.mxu0 0.0
    %253 = vmatpush1.xpose.msra.mxu0 0.0
    %254 = vmatprep.subr.mxu0 0.0
    %255 = vmatpush1.xpose.msra.mxu0 0.0
    %256 = vmatprep.subr.mxu0 0.0
    %257 = vmatpush1.xpose.msra.mxu0 0.0
    %258 = vmatprep.subr.mxu0 0.0
    %259 = vmatpush1.xpose.msra.mxu0 0.0
    %260 = vmatprep.subr.mxu0 0.0
    %261 = vmatpush1.xpose.msra.mxu0 0.0
    %262 = vmatprep.subr.mxu0 0.0
    %263 = vmatpush1.xpose.msra.mxu0 0.0
    %264 = vmatprep.subr.mxu0 0.0
    %265 = vmatpush1.xpose.msra.mxu0 0.0
    %266 = vmatprep.subr.mxu0 0.0
    %267 = vmatpush1.xpose.msra.mxu0 0.0
    %268 = vmatprep.subr.mxu0 0.0
    %269 = vmatpush1.xpose.msra.mxu0 0.0
    %270 = vmatprep.subr.mxu0 0.0
    %271 = vmatpush1.xpose.msra.mxu0 0.0
    %272 = vmatprep.subr.mxu0 0.0
    %273 = vmatpush1.xpose.msra.mxu0 0.0
    %274 = vmatprep.mubr.f32.mxu0 0.0
    %275 = vmatmul.mubr.f32.gmra.mrb[0].mxu0 %v160
    %v276 = vpop.f32.mrb[0].mxu0
    %v277 = vadd.f32 0.0, %v276
    %v278 = vpop.f32.mrb[0].mxu0
    %279 = vdwg.mxu0
    %v280 = vld [vmem:[%s2] sm:$0xff]
    %v281 = vlaneseq
    %v282 = vand.u32 %v281, 127
    %s283 = smul.u32 0, 128
    %v284 = vstv %s283
    %v285 = vadd.s32 %v282, %v284
    %286 = vset.pattern.permute.xlu0 0
    %287 = vperm.xlu0 %286, %v280
    %v288 = vpop.permute.xlu0 %287
    %vm289 = vcmp.eq.s32.totalorder %v285, %v288
    %v290 = vsel %vm289, %v277, 0.0
    %291 = vadd.xlane.f32.xlu0 %v290
    %v292 = vpop.xlane.xlu0 %291
    %v293 = vmul.f32 %v292, %v292
    %v294 = vsub.f32 1.0, %v293
    %v295 = vmax.f32 %v294, 0.0
    %v296 = vrsqrt.pop %v295
    %v297 = vmul.f32 %v295, %v296
    %vm298 = vcmp.eq.f32.partialorder %v295, inf
    %v299 = vsel %vm298, %v295, %v297
    %vm300 = vcmp.eq.f32.partialorder %v295, 0.0
    %v301 = vand.u32 %v295, 2147483648
    %v302 = vsel %vm300, %v301, %v299
    %v303 = vmul.f32 %v292, 0.87758255
    %v304 = vmul.f32 %v302, 0.47942555
    %v305 = vsub.f32 %v303, %v304
    %vm306 = vcmp.gt.f32.partialorder %v292, -0.87758255
    %v307 = vsub.f32 %v292, 0.23971277
    %v308 = vsel %vm306, %v305, %v307
    %v309 = vsel %vm289, %v308, %v277
    %v310 = vmul.f32 %v309, 30.0
    %311 = vst [vmem:[#allocation3] sm:$0xff] %v310
    // Predicated region
    $region18: #{tpu_custom_call.1} parent=1 // pred_check
      _
    $region19: #{tpu_custom_call.1} parent=1 // pred_check_branch
      %313 = sbr.rel (0) target = $region21
    $region20: #{tpu_custom_call.1} parent=1 // pred_region
      %s315 = ssub.s32 128, 128
      %316 = vsyncadd [#allocation4], %s315
      %s318 = sshll.u32 [#allocation3], 4
      %s319 = int_to_ptr.vmem [resolvable:$true] %s318
      %321 = dma.vmem_to_hbm [thread:$0]  %s319, 128, %s3, [#allocation4]
    $region21: #{tpu_custom_call.1} parent=1 // pred_fallthru
      _
    // Predicated region
    $region22: #{tpu_custom_call.1} parent=1 // pred_check
      _
    $region23: #{tpu_custom_call.1} parent=1 // pred_check_branch
      %323 = sbr.rel (0) target = $region25
    $region24: #{tpu_custom_call.1} parent=1 // pred_region
      %324 = dma.done [#allocation4], 128
    $region25: #{tpu_custom_call.1} parent=1 // pred_fallthru
      _
    %325 = vsyncpa [#allocation4], 1

</llo_original>
